<compile_context>
chip_gen: v7x
topology: tpu7x:2x2x1
jax: 0.10.0
libtpu: 0.0.40
codegen_flags: <defaults>
</compile_context>

<pallas_src>
import functools
import math

import jax
import jax.numpy as jnp
from jax.experimental import pallas as pl
from jax.experimental.pallas import tpu as pltpu


def _round_up(x, m):
    return ((x + m - 1) // m) * m


def _next_pow2(x):
    return 1 if x <= 1 else 1 << (x - 1).bit_length()


def _mxu_dot(a, b, mxu_dtype):
    return jnp.dot(a.astype(mxu_dtype), b.astype(mxu_dtype),
                   preferred_element_type=jnp.float32)


# ------------------- Stage 1 (prologue): G and [A|Bm] in one O(L) parallel pass -----------------
def _prologue_kernel(hcat_ref, hn_ref, wn_ref, bn_ref, w1ab_ref, g_ref, ab_ref, *, mxu_dtype):
    # g = tanh([h_share, h_ner] @ Wn + bn); the max over L happens in the wrapper (XLA),
    # which keeps this grid fully parallel (both v7x TensorCores can participate).
    g_ref[...] = jnp.tanh(_mxu_dot(hcat_ref[...], wn_ref[...], mxu_dtype) + bn_ref[...])
    # Hoisted hid2hid "start"/"end" halves as a single fused N=2H matmul.
    ab_ref[...] = _mxu_dot(hn_ref[...], w1ab_ref[...], mxu_dtype)


# ------------------- Stage 2: tiled pairwise (start, end) scores --------------------------------
def _pair_kernel(a_ref, b_ref, ma_ref, mb_ref, mi_ref, mj_ref,
                 gamma_ref, beta_ref, w2_ref, b2_ref, out_ref, *, mxu_dtype):
    i = pl.program_id(0)
    j = pl.program_id(1)
    TI, B, H = a_ref.shape
    TJ = b_ref.shape[0]
    NL = w2_ref.shape[1]

    # Tiles entirely below the diagonal (every pair has end < start) are all-zero.
    skip = (j * TJ + (TJ - 1)) < (i * TI)

    @pl.when(skip)
    def _():
        out_ref[...] = jnp.zeros_like(out_ref)

    @pl.when(jnp.logical_not(skip))
    def _():
        # pre[ti, tj, b] = A[i0+ti, b] + (Bm + C)[j0+tj, b]   (C already folded into Bm)
        pre = a_ref[...][:, None] + b_ref[...][None, :]                       # (TI,TJ,B,H)

        # LayerNorm (eps=1e-5).  Per-row means were precomputed (mean is linear in A, Bm+C),
        # so only the variance needs a lane reduction here; the centered value is reused.
        mean = ma_ref[...][:, None, :, None] + mb_ref[...][None, :, :, None]  # (TI,TJ,B,1)
        xc = (pre - mean).reshape(TI * TJ * B, H)
        var = jnp.mean(xc * xc, axis=-1, keepdims=True)
        x = xc * jax.lax.rsqrt(var + 1e-5)
        x = x * gamma_ref[...] + beta_ref[...]

        # TODO(synk): nn.Dropout is stochastic in training; identity at inference, so omitted.
        # ELU (alpha = 1).
        x = jnp.where(x > 0.0, x, jnp.exp(jnp.minimum(x, 0.0)) - 1.0)

        # hid2tag + sigmoid: one (TI*TJ*B, H) x (H, NL) MXU matmul per tile.
        sig = jax.nn.sigmoid(_mxu_dot(x, w2_ref[...], mxu_dtype) + b2_ref[...])
        sig = sig.reshape(TI, TJ, B, NL)

        # mask_ner[ti, tj, b] = mask[i0+ti, b] * mask[j0+tj, b] * (j0+tj >= i0+ti)
        gi = i * TI + jax.lax.broadcasted_iota(jnp.int32, (TI, TJ), 0)
        gj = j * TJ + jax.lax.broadcasted_iota(jnp.int32, (TI, TJ), 1)
        m = mi_ref[...][:, None, :] * mj_ref[...][None, :, :]                 # (TI,TJ,B)
        m = jnp.where((gj >= gi)[:, :, None], m, 0.0)

        # Lane-dense store: one (TI, TJ*B*NL) slab per grid step.
        out_ref[...] = (sig * m[..., None]).reshape(TI, TJ * B * NL)


# ------------------- Wrapper ---------------------------------------------------------------------
def ner_unit_forward(h_ner, h_share, mask, params, *, ti=None, tj=None, tl=None,
                     mxu_dtype=jnp.float32, pair_vmem_budget=16 << 20):
    """h_ner/h_share: (L,B,H) f32, mask: (L,B) f32 -> (L, L, B, num_labels) f32."""
    L, B, H = h_ner.shape
    NL = params["W2"].shape[1]

    # ---- Tile selection: powers of two, lane-dense output, VMEM-budgeted pair tiles ----
    lane_q = 128 // math.gcd(B * NL, 128)          # tj granularity for a 128-multiple lane width
    cap = _next_pow2(_round_up(L, 8))              # never tile beyond the (padded) length

    def pair_bytes(ti_, tj_):                      # rough live-VMEM model for one stage-2 step
        temps = 6 * ti_ * tj_ * B * H * 4          # pre / xc / x / sig-class f32 temporaries
        io = 2 * 4 * (ti_ * B * H + tj_ * B * H + ti_ * tj_ * B * NL)   # double-buffered blocks
        return temps + io

    if tj is None:
        tj = min(max(lane_q, 8), cap)
    if ti is None:
        ti = min(8, cap)
        grew = True
        while grew:                                # grow ti first (amortizes Bm re-streaming)
            grew = False
            if ti * 2 <= cap and pair_bytes(ti * 2, tj) <= pair_vmem_budget:
                ti *= 2
                grew = True
            if tj * 2 <= cap and pair_bytes(ti, tj * 2) <= pair_vmem_budget:
                tj *= 2
                grew = True
    if tl is None:
        # Fill the prologue MXU M-dim (>= ~128-256 rows) without inflating Lp beyond stage-2 tiles.
        tl = min(cap, max(ti, tj, _next_pow2(max(8, 128 // max(B, 1)))))

    Lp = _round_up(L, max(tl, ti, tj))
    assert Lp % tl == 0 and Lp % ti == 0 and Lp % tj == 0, (Lp, tl, ti, tj)
    assert (tl * B) % 8 == 0 or tl == Lp
    assert ti % 8 == 0 or ti == Lp
    # Lane-dense output guard: avoids masked vst.msk partial stores on the big O(L^2) output.
    assert (tj * B * NL) % 128 == 0 or tj == Lp, (tj, B, NL)

    pad = Lp - L
    hs_p = jnp.pad(h_share, ((0, pad), (0, 0), (0, 0)))
    hn_p = jnp.pad(h_ner, ((0, pad), (0, 0), (0, 0)))
    mask_p = jnp.pad(mask, ((0, pad), (0, 0)))

    # 2-D (Lp*B, ...) row layouts for stage 1: B never sits alone on the sublane axis.
    hcat2 = jnp.concatenate([hs_p, hn_p], axis=-1).reshape(Lp * B, 2 * H)
    hn2 = hn_p.reshape(Lp * B, H)

    # ---- Stage 1: one parallel pass over rows ----
    G, AB = pl.pallas_call(
        functools.partial(_prologue_kernel, mxu_dtype=mxu_dtype),
        out_shape=(
            jax.ShapeDtypeStruct((Lp * B, H), jnp.float32),        # tanh(n([hs,hn]))
            jax.ShapeDtypeStruct((Lp * B, 2 * H), jnp.float32),    # [A | Bm]
        ),
        grid=(Lp // tl,),
        in_specs=[
            pl.BlockSpec((tl * B, 2 * H), lambda l: (l, 0)),       # [h_share, h_ner] rows
            pl.BlockSpec((tl * B, H), lambda l: (l, 0)),           # h_ner rows
            pl.BlockSpec((2 * H, H), lambda l: (0, 0)),            # Wn
            pl.BlockSpec((1, H), lambda l: (0, 0)),                # bn
            pl.BlockSpec((H, 2 * H), lambda l: (0, 0)),            # [W1_start | W1_end]
        ],
        out_specs=(
            pl.BlockSpec((tl * B, H), lambda l: (l, 0)),
            pl.BlockSpec((tl * B, 2 * H), lambda l: (l, 0)),
        ),
        compiler_params=pltpu.CompilerParams(dimension_semantics=("parallel",)),
    )(hcat2, hn2, params["Wn"], params["bn"], params["W1ab"])

    # ---- Cheap O(L*B*H) epilogue in XLA: global max, C folded into Bm, LN row means ----
    valid = (jnp.arange(Lp) < L)[:, None, None]
    h_global = jnp.max(jnp.where(valid, G.reshape(Lp, B, H), -jnp.inf), axis=0)   # (B, H)
    C = h_global @ params["W1c"] + params["b1"]                                    # (B, H)
    A3 = AB[:, :H].reshape(Lp, B, H)
    B3 = AB[:, H:].reshape(Lp, B, H) + C[None]
    mA = jnp.mean(A3, axis=-1)     # (Lp, B) per-row LayerNorm mean contributions
    mB = jnp.mean(B3, axis=-1)     # (Lp, B)

    vmem_limit = int(min(64 << 20, max(32 << 20, 2 * pair_bytes(ti, tj))))

    # ---- Stage 2: tiled pairwise scores ----
    out_flat = pl.pallas_call(
        functools.partial(_pair_kernel, mxu_dtype=mxu_dtype),
        out_shape=jax.ShapeDtypeStruct((Lp, Lp * B * NL), jnp.float32),
        grid=(Lp // ti, Lp // tj),
        in_specs=[
            pl.BlockSpec((ti, B, H), lambda i, j: (i, 0, 0)),      # A[i-tile]
            pl.BlockSpec((tj, B, H), lambda i, j: (j, 0, 0)),      # (Bm + C)[j-tile]
            pl.BlockSpec((ti, B), lambda i, j: (i, 0)),            # mean(A) rows
            pl.BlockSpec((tj, B), lambda i, j: (j, 0)),            # mean(Bm + C) rows
            pl.BlockSpec((ti, B), lambda i, j: (i, 0)),            # mask rows (start side)
            pl.BlockSpec((tj, B), lambda i, j: (j, 0)),            # mask rows (end side)
            pl.BlockSpec((1, H), lambda i, j: (0, 0)),             # LayerNorm gamma
            pl.BlockSpec((1, H), lambda i, j: (0, 0)),             # LayerNorm beta
            pl.BlockSpec((H, NL), lambda i, j: (0, 0)),            # W2
            pl.BlockSpec((1, NL), lambda i, j: (0, 0)),            # b2
        ],
        out_specs=pl.BlockSpec((ti, tj * B * NL), lambda i, j: (i, j)),
        compiler_params=pltpu.CompilerParams(
            dimension_semantics=("parallel", "parallel"),
            vmem_limit_bytes=vmem_limit),
    )(A3, B3, mA, mB, mask_p, mask_p,
      params["gamma"], params["beta"], params["W2"], params["b2"])

    return out_flat.reshape(Lp, Lp, B, NL)[:L, :L]


# ------------------- Pure-JAX reference (for verification) --------------------------------------
def ref_forward(h_ner, h_share, mask, Wn, bn, W1, b1, gamma, beta, W2, b2):
    L, B, H = h_ner.shape
    hg = jnp.tanh(jnp.concatenate([h_share, h_ner], -1) @ Wn + bn)
    hg = jnp.max(hg, axis=0)                                         # (B, H)
    st = jnp.broadcast_to(h_ner[:, None], (L, L, B, H))
    en = jnp.broadcast_to(h_ner[None, :], (L, L, B, H))
    gg = jnp.broadcast_to(hg[None, None], (L, L, B, H))
    ner = jnp.concatenate([st, en, gg], -1) @ W1 + b1
    mean = ner.mean(-1, keepdims=True)
    var = ((ner - mean) ** 2).mean(-1, keepdims=True)
    x = (ner - mean) / jnp.sqrt(var + 1e-5) * gamma + beta
    x = jnp.where(x > 0.0, x, jnp.exp(jnp.minimum(x, 0.0)) - 1.0)
    sig = jax.nn.sigmoid(x @ W2 + b2)
    tri = (jnp.arange(L)[None, :] >= jnp.arange(L)[:, None]).astype(jnp.float32)   # j >= i
    mask_ner = mask[:, None, :] * mask[None, :, :] * tri[:, :, None]
    return sig * mask_ner[..., None]


# ------------------- Parameter init --------------------------------------------------------------
def init_linear(key, fan_in, fan_out):
    bound = 1.0 / jnp.sqrt(jnp.float32(fan_in))
    kw, kb = jax.random.split(key)
    W = jax.random.uniform(kw, (fan_in, fan_out), jnp.float32, -bound, bound)
    b = jax.random.uniform(kb, (1, fan_out), jnp.float32, -bound, bound)
    return W, b


if __name__ == "__main__":
    L, B, H, NL = 16, 2, 32, 4

    key = jax.random.PRNGKey(0)
    k1, k2, k3, k4, k5 = jax.random.split(key, 5)
    h_ner = jax.random.normal(k1, (L, B, H), jnp.float32)
    h_share = jax.random.normal(k2, (L, B, H), jnp.float32)
    lengths = jnp.array([L, 11])
    mask = (jnp.arange(L)[:, None] < lengths[None, :]).astype(jnp.float32)   # (L, B)

    Wn, bn = init_linear(k3, 2 * H, H)     # self.n      : Linear(2H -> H)
    W1, b1 = init_linear(k4, 3 * H, H)     # self.hid2hid: Linear(3H -> H)
    W2, b2 = init_linear(k5, H, NL)        # self.hid2tag: Linear(H  -> NL)
    gamma = jnp.ones((1, H), jnp.float32)  # self.ln
    beta = jnp.zeros((1, H), jnp.float32)

    params = dict(
        Wn=Wn, bn=bn,
        W1ab=jnp.concatenate([W1[:H], W1[H:2 * H]], axis=1),   # (H, 2H): [start | end] halves
        W1c=W1[2 * H:], b1=b1,
        gamma=gamma, beta=beta, W2=W2, b2=b2,
    )

    out = ner_unit_forward(h_ner, h_share, mask, params)
    out = jax.block_until_ready(out)

    ref = ref_forward(h_ner, h_share, mask, Wn, bn, W1, b1, gamma, beta, W2, b2)
    assert out.shape == (L, L, B, NL), out.shape
    if not jnp.allclose(out, ref, atol=1e-4, rtol=1e-4):
        raise AssertionError("Pallas kernel output does not match reference")

    print("KERNEL_OK")
</pallas_src>

<mosaic_0001>
module attributes {stable_mosaic.version = 11 : i64} {
  func.func @_prologue_kernel(%arg0: i32, %arg1: memref<32x64xf32, #tpu.memory_space<vmem>>, %arg2: memref<32x32xf32, #tpu.memory_space<vmem>>, %arg3: memref<64x32xf32, #tpu.memory_space<vmem>>, %arg4: memref<1x32xf32, #tpu.memory_space<vmem>>, %arg5: memref<32x64xf32, #tpu.memory_space<vmem>>, %arg6: memref<32x32xf32, #tpu.memory_space<vmem>>, %arg7: memref<32x64xf32, #tpu.memory_space<vmem>>) attributes {dimension_semantics = [#tpu.dimension_semantics<parallel>], iteration_bounds = array<i64: 1>, scalar_prefetch = 0 : i64, scratch_operands = 0 : i64, tpu.core_type = #tpu.core_type<tc>, window_params = [{transform_indices = @transform_0, window_bounds = array<i64: 32, 64>}, {transform_indices = @transform_1, window_bounds = array<i64: 32, 32>}, {pipeline_mode = #tpu.pipeline_mode<synchronous>, transform_indices = @transform_2, window_bounds = array<i64: 64, 32>}, {pipeline_mode = #tpu.pipeline_mode<synchronous>, transform_indices = @transform_3, window_bounds = array<i64: 1, 32>}, {pipeline_mode = #tpu.pipeline_mode<synchronous>, transform_indices = @transform_4, window_bounds = array<i64: 32, 64>}, {transform_indices = @transform_5, window_bounds = array<i64: 32, 32>}, {transform_indices = @transform_6, window_bounds = array<i64: 32, 64>}]} {
    %c0 = arith.constant 0 : index
    %c0_0 = arith.constant 0 : index
    %0 = vector.load %arg1[%c0, %c0_0] : memref<32x64xf32, #tpu.memory_space<vmem>>, vector<32x64xf32>
    %c0_1 = arith.constant 0 : index
    %c0_2 = arith.constant 0 : index
    %1 = vector.load %arg3[%c0_1, %c0_2] : memref<64x32xf32, #tpu.memory_space<vmem>>, vector<64x32xf32>
    %cst = arith.constant dense<0.000000e+00> : vector<32x32xf32>
    %2 = tpu.matmul %0, %1, %cst {dimension_numbers = #tpu.dot_dimension_numbers<[1], [0], [0], [1], [0, 0, 1, 1], [], []>} : vector<32x64xf32>, vector<64x32xf32>, vector<32x32xf32> -> vector<32x32xf32>
    %c0_3 = arith.constant 0 : index
    %c0_4 = arith.constant 0 : index
    %3 = vector.load %arg4[%c0_3, %c0_4] : memref<1x32xf32, #tpu.memory_space<vmem>>, vector<1x32xf32>
    %4 = vector.broadcast %3 : vector<1x32xf32> to vector<32x32xf32>
    %5 = arith.addf %2, %4 : vector<32x32xf32>
    %6 = math.tanh %5 : vector<32x32xf32>
    %c0_5 = arith.constant 0 : index
    %c0_6 = arith.constant 0 : index
    %7 = vector.load %arg6[%c0_5, %c0_6] : memref<32x32xf32, #tpu.memory_space<vmem>>, vector<32x32xf32>
    tpu.vector_store %arg6[%c0_5, %c0_6], %6 {strides = array<i32>} : memref<32x32xf32, #tpu.memory_space<vmem>>, vector<32x32xf32>,
    %c0_7 = arith.constant 0 : index
    %c0_8 = arith.constant 0 : index
    %8 = vector.load %arg2[%c0_7, %c0_8] : memref<32x32xf32, #tpu.memory_space<vmem>>, vector<32x32xf32>
    %c0_9 = arith.constant 0 : index
    %c0_10 = arith.constant 0 : index
    %9 = vector.load %arg5[%c0_9, %c0_10] : memref<32x64xf32, #tpu.memory_space<vmem>>, vector<32x64xf32>
    %cst_11 = arith.constant dense<0.000000e+00> : vector<32x64xf32>
    %10 = tpu.matmul %8, %9, %cst_11 {dimension_numbers = #tpu.dot_dimension_numbers<[1], [0], [0], [1], [0, 0, 1, 1], [], []>} : vector<32x32xf32>, vector<32x64xf32>, vector<32x64xf32> -> vector<32x64xf32>
    %c0_12 = arith.constant 0 : index
    %c0_13 = arith.constant 0 : index
    %11 = vector.load %arg7[%c0_12, %c0_13] : memref<32x64xf32, #tpu.memory_space<vmem>>, vector<32x64xf32>
    tpu.vector_store %arg7[%c0_12, %c0_13], %10 {strides = array<i32>} : memref<32x64xf32, #tpu.memory_space<vmem>>, vector<32x64xf32>,
    return
  }
  func.func @transform_0(%arg0: i32) -> (i32, i32) {
    %c0_i32 = arith.constant 0 : i32
    %c0_i32_0 = arith.constant 0 : i32
    return %arg0, %c0_i32 : i32, i32
  }
  func.func @transform_1(%arg0: i32) -> (i32, i32) {
    %c0_i32 = arith.constant 0 : i32
    %c0_i32_0 = arith.constant 0 : i32
    return %arg0, %c0_i32 : i32, i32
  }
  func.func @transform_2(%arg0: i32) -> (i32, i32) {
    %c0_i32 = arith.constant 0 : i32
    %c0_i32_0 = arith.constant 0 : i32
    %c0_i32_1 = arith.constant 0 : i32
    return %c0_i32, %c0_i32_0 : i32, i32
  }
  func.func @transform_3(%arg0: i32) -> (i32, i32) {
    %c0_i32 = arith.constant 0 : i32
    %c0_i32_0 = arith.constant 0 : i32
    %c0_i32_1 = arith.constant 0 : i32
    return %c0_i32, %c0_i32_0 : i32, i32
  }
  func.func @transform_4(%arg0: i32) -> (i32, i32) {
    %c0_i32 = arith.constant 0 : i32
    %c0_i32_0 = arith.constant 0 : i32
    %c0_i32_1 = arith.constant 0 : i32
    return %c0_i32, %c0_i32_0 : i32, i32
  }
  func.func @transform_5(%arg0: i32) -> (i32, i32) {
    %c0_i32 = arith.constant 0 : i32
    %c0_i32_0 = arith.constant 0 : i32
    return %arg0, %c0_i32 : i32, i32
  }
  func.func @transform_6(%arg0: i32) -> (i32, i32) {
    %c0_i32 = arith.constant 0 : i32
    %c0_i32_0 = arith.constant 0 : i32
    return %arg0, %c0_i32 : i32, i32
  }
}

</mosaic_0001>

<llo_original>
// kernel: tpu_custom_call.1
$region0: #{tpu_custom_call.1}
  #allocation0 [shape = 'u32[]', space=smem, size = 0x4, offset = 0x4, fixed_abs, tag = 'smem constant byte address 0x4 - core index']
  #allocation1 [shape = 'u32[144,128]{1,0:T(1,128)}', space=vmem, size = 0x12000, scoped, tag = 'internal scratch']
  %s0 = inlined_call_operand.vmem [shape: f32[32,64], index: 0, kind: input, shape index: {}]
  %s1 = inlined_call_operand.vmem [shape: f32[32,32], index: 1, kind: input, shape index: {}]
  %s2 = inlined_call_operand.vmem [shape: f32[64,32], index: 2, kind: input, shape index: {}]
  %s3 = inlined_call_operand.vmem [shape: f32[1,32], index: 3, kind: input, shape index: {}]
  %s4 = inlined_call_operand.vmem [shape: f32[32,64], index: 4, kind: input, shape index: {}]
  %s5 = inlined_call_operand.hbm [shape: f32[32,32], index: 5, kind: output, shape index: {0}]
  %s6 = inlined_call_operand.hbm [shape: f32[32,64], index: 6, kind: output, shape index: {1}]
  %7 = xla_tuple %s5, %s6
  %s8 = sld [smem:[#allocation0]]
  $region38: #{tpu_custom_call.1} parent=0
    _
  %s10 = ssub.s32 1, %s8
  %s11 = scalar_select 0, %s10, %s8
  $region1: #{tpu_custom_call.1} parent=0
    #allocation2 [shape = 'u8[16384]{0}', space=vmem, size = 0x4000, scoped, tag = 'output window, operand 0, single buffered']
    #allocation3 [shape = 's32[1]{0}', space=sflag, size = 0x4, scoped, tag = 'scoped memory for tpu_custom_call.1']
    #allocation4 [shape = 'u8[16384]{0}', space=vmem, size = 0x4000, scoped, tag = 'output window, operand 1, single buffered']
    #allocation5 [shape = 's32[1]{0}', space=sflag, size = 0x4, scoped, tag = 'scoped memory for tpu_custom_call.1']
    %12 = vsyncpa [#allocation3], 0
    %13 = vsyncpa [#allocation5], 0
    // Predicated region
    $region2: #{tpu_custom_call.1} parent=1 // pred_check
      _
    $region3: #{tpu_custom_call.1} parent=1 // pred_check_branch
      %15 = sbr.rel (0) target = $region5
    $region4: #{tpu_custom_call.1} parent=1 // pred_region
      _
    $region5: #{tpu_custom_call.1} parent=1 // pred_fallthru
      _
    // Predicated region
    $region6: #{tpu_custom_call.1} parent=1 // pred_check
      _
    $region7: #{tpu_custom_call.1} parent=1 // pred_check_branch
      %17 = sbr.rel (0) target = $region9
    $region8: #{tpu_custom_call.1} parent=1 // pred_region
      _
    $region9: #{tpu_custom_call.1} parent=1 // pred_fallthru
      _
    // Predicated region
    $region10: #{tpu_custom_call.1} parent=1 // pred_check
      _
    $region11: #{tpu_custom_call.1} parent=1 // pred_check_branch
      %19 = sbr.rel (0) target = $region13
    $region12: #{tpu_custom_call.1} parent=1 // pred_region
      _
    $region13: #{tpu_custom_call.1} parent=1 // pred_fallthru
      _
    // Predicated region
    $region14: #{tpu_custom_call.1} parent=1 // pred_check
      _
    $region15: #{tpu_custom_call.1} parent=1 // pred_check_branch
      %21 = sbr.rel (0) target = $region17
    $region16: #{tpu_custom_call.1} parent=1 // pred_region
      _
    $region17: #{tpu_custom_call.1} parent=1 // pred_fallthru
      _
    // Predicated region
    $region18: #{tpu_custom_call.1} parent=1 // pred_check
      _
    $region19: #{tpu_custom_call.1} parent=1 // pred_check_branch
      %23 = sbr.rel (0) target = $region21
    $region20: #{tpu_custom_call.1} parent=1 // pred_region
      _
    $region21: #{tpu_custom_call.1} parent=1 // pred_fallthru
      _
    %v24 = vld [vmem:[%s0] sm:$0xff]
    %v25 = vld [vmem:[%s0 + $0x8] sm:$0xff]
    %v26 = vld [vmem:[%s0 + $0x10] sm:$0xff]
    %v27 = vld [vmem:[%s0 + $0x18] sm:$0xff]
    %v28 = vld [vmem:[%s2] sm:$0xff]
    %v29 = vld [vmem:[%s2 + $0x8] sm:$0xff]
    %v30 = vld [vmem:[%s2 + $0x10] sm:$0xff]
    %v31 = vld [vmem:[%s2 + $0x18] sm:$0xff]
    %v32 = vld [vmem:[%s2 + $0x20] sm:$0xff]
    %v33 = vld [vmem:[%s2 + $0x28] sm:$0xff]
    %v34 = vld [vmem:[%s2 + $0x30] sm:$0xff]
    %v35 = vld [vmem:[%s2 + $0x38] sm:$0xff]
    %v36 = vld [vmem:[%s3] sm:$0x1]
    %v38 = vlaneseq
    %v39 = vshrl.u32 %v38, 7
    %v40 = vsub.s32 0, %v39
    %v41 = vrot.slane %v36, %v40
    %vm43 = vcmask 523264
    %v45 = vsel %vm43, %v24, 0
    %v48 = vsel %vm43, %v25, 0
    %v51 = vsel %vm43, %v26, 0
    %v54 = vsel %vm43, %v27, 0
    %56 = vmatprep.subr.mxu0 0.0
    %57 = vmatpush1.msra.mxu0 %v28
    %58 = vmatprep.subr.mxu0 0.0
    %59 = vmatpush1.msra.mxu0 %v29
    %60 = vmatprep.subr.mxu0 0.0
    %61 = vmatpush1.msra.mxu0 %v30
    %62 = vmatprep.subr.mxu0 0.0
    %63 = vmatpush1.msra.mxu0 %v31
    %64 = vmatprep.subr.mxu0 0.0
    %65 = vmatpush1.msra.mxu0 %v32
    %66 = vmatprep.subr.mxu0 0.0
    %67 = vmatpush1.msra.mxu0 %v33
    %68 = vmatprep.subr.mxu0 0.0
    %69 = vmatpush1.msra.mxu0 %v34
    %70 = vmatprep.subr.mxu0 0.0
    %71 = vmatpush1.msra.mxu0 %v35
    %72 = vmatprep.subr.mxu0 0.0
    %73 = vmatpush1.msra.mxu0 0.0
    %74 = vmatprep.subr.mxu0 0.0
    %75 = vmatpush1.msra.mxu0 0.0
    %76 = vmatprep.subr.mxu0 0.0
    %77 = vmatpush1.msra.mxu0 0.0
    %78 = vmatprep.subr.mxu0 0.0
    %79 = vmatpush1.msra.mxu0 0.0
    %80 = vmatprep.subr.mxu0 0.0
    %81 = vmatpush1.msra.mxu0 0.0
    %82 = vmatprep.subr.mxu0 0.0
    %83 = vmatpush1.msra.mxu0 0.0
    %84 = vmatprep.subr.mxu0 0.0
    %85 = vmatpush1.msra.mxu0 0.0
    %86 = vmatprep.subr.mxu0 0.0
    %87 = vmatpush1.msra.mxu0 0.0
    %88 = vmatprep.subr.mxu0 0.0
    %89 = vmatpush1.msra.mxu0 0.0
    %90 = vmatprep.subr.mxu0 0.0
    %91 = vmatpush1.msra.mxu0 0.0
    %92 = vmatprep.subr.mxu0 0.0
    %93 = vmatpush1.msra.mxu0 0.0
    %94 = vmatprep.subr.mxu0 0.0
    %95 = vmatpush1.msra.mxu0 0.0
    %96 = vmatprep.subr.mxu0 0.0
    %97 = vmatpush1.msra.mxu0 0.0
    %98 = vmatprep.subr.mxu0 0.0
    %99 = vmatpush1.msra.mxu0 0.0
    %100 = vmatprep.subr.mxu0 0.0
    %101 = vmatpush1.msra.mxu0 0.0
    %102 = vmatprep.subr.mxu0 0.0
    %103 = vmatpush1.msra.mxu0 0.0
    %104 = vmatprep.subr.mxu0 0.0
    %105 = vmatpush1.msra.mxu0 0.0
    %106 = vmatprep.subr.mxu0 0.0
    %107 = vmatpush1.msra.mxu0 0.0
    %108 = vmatprep.subr.mxu0 0.0
    %109 = vmatpush1.msra.mxu0 0.0
    %110 = vmatprep.subr.mxu0 0.0
    %111 = vmatpush1.msra.mxu0 0.0
    %112 = vmatprep.subr.mxu0 0.0
    %113 = vmatpush1.msra.mxu0 0.0
    %114 = vmatprep.subr.mxu0 0.0
    %115 = vmatpush1.msra.mxu0 0.0
    %116 = vmatprep.subr.mxu0 0.0
    %117 = vmatpush1.msra.mxu0 0.0
    %118 = vmatprep.subr.mxu0 0.0
    %119 = vmatpush1.msra.mxu0 0.0
    %120 = vmatprep.mubr.f32.mxu0 0.0
    %121 = vmatmul.mubr.f32.gmra.mrb[0].mxu0 %v45
    %v122 = vpop.f32.mrb[0].mxu0
    %v123 = vadd.f32 %v41, %v122
    %v124 = vpop.f32.mrb[0].mxu0
    %125 = vmatprep.mubr.f32.mxu0 0.0
    %126 = vmatmul.mubr.f32.gmra.mrb[0].mxu0 %v48
    %v127 = vpop.f32.mrb[0].mxu0
    %v128 = vadd.f32 %v41, %v127
    %v129 = vpop.f32.mrb[0].mxu0
    %130 = vmatprep.mubr.f32.mxu0 0.0
    %131 = vmatmul.mubr.f32.gmra.mrb[0].mxu0 %v51
    %v132 = vpop.f32.mrb[0].mxu0
    %v133 = vadd.f32 %v41, %v132
    %v134 = vpop.f32.mrb[0].mxu0
    %135 = vmatprep.mubr.f32.mxu0 0.0
    %136 = vmatmul.mubr.f32.gmra.mrb[0].mxu0 %v54
    %v137 = vpop.f32.mrb[0].mxu0
    %v138 = vadd.f32 %v41, %v137
    %v139 = vpop.f32.mrb[0].mxu0
    %140 = vdwg.mxu0
    %v141 = vtanh.pop %v123
    %v142 = vtanh.pop %v128
    %v143 = vtanh.pop %v133
    %v144 = vtanh.pop %v138
    %vm145 = vcmask 261120
    %146 = vst.msk [vmem:[#allocation2] sm:$0xff] %vm145, %v141
    %147 = vst.msk [vmem:[#allocation2 + $0x8] sm:$0xff] %vm145, %v142
    %148 = vst.msk [vmem:[#allocation2 + $0x10] sm:$0xff] %vm145, %v143
    %149 = vst.msk [vmem:[#allocation2 + $0x18] sm:$0xff] %vm145, %v144
    %v150 = vld [vmem:[%s1] sm:$0xff]
    %v151 = vld [vmem:[%s1 + $0x8] sm:$0xff]
    %v152 = vld [vmem:[%s1 + $0x10] sm:$0xff]
    %v153 = vld [vmem:[%s1 + $0x18] sm:$0xff]
    %v154 = vld [vmem:[%s4] sm:$0xff]
    %v155 = vld [vmem:[%s4 + $0x8] sm:$0xff]
    %v156 = vld [vmem:[%s4 + $0x10] sm:$0xff]
    %v157 = vld [vmem:[%s4 + $0x18] sm:$0xff]
    %v159 = vsel %vm145, %v150, 0
    %v162 = vsel %vm145, %v151, 0
    %v165 = vsel %vm145, %v152, 0
    %v168 = vsel %vm145, %v153, 0
    %170 = vmatprep.subr.mxu0 0.0
    %171 = vmatpush1.msra.mxu0 %v154
    %172 = vmatprep.subr.mxu0 0.0
    %173 = vmatpush1.msra.mxu0 %v155
    %174 = vmatprep.subr.mxu0 0.0
    %175 = vmatpush1.msra.mxu0 %v156
    %176 = vmatprep.subr.mxu0 0.0
    %177 = vmatpush1.msra.mxu0 %v157
    %178 = vmatprep.subr.mxu0 0.0
    %179 = vmatpush1.msra.mxu0 0.0
    %180 = vmatprep.subr.mxu0 0.0
    %181 = vmatpush1.msra.mxu0 0.0
    %182 = vmatprep.subr.mxu0 0.0
    %183 = vmatpush1.msra.mxu0 0.0
    %184 = vmatprep.subr.mxu0 0.0
    %185 = vmatpush1.msra.mxu0 0.0
    %186 = vmatprep.subr.mxu0 0.0
    %187 = vmatpush1.msra.mxu0 0.0
    %188 = vmatprep.subr.mxu0 0.0
    %189 = vmatpush1.msra.mxu0 0.0
    %190 = vmatprep.subr.mxu0 0.0
    %191 = vmatpush1.msra.mxu0 0.0
    %192 = vmatprep.subr.mxu0 0.0
    %193 = vmatpush1.msra.mxu0 0.0
    %194 = vmatprep.subr.mxu0 0.0
    %195 = vmatpush1.msra.mxu0 0.0
    %196 = vmatprep.subr.mxu0 0.0
    %197 = vmatpush1.msra.mxu0 0.0
    %198 = vmatprep.subr.mxu0 0.0
    %199 = vmatpush1.msra.mxu0 0.0
    %200 = vmatprep.subr.mxu0 0.0
    %201 = vmatpush1.msra.mxu0 0.0
    %202 = vmatprep.subr.mxu0 0.0
    %203 = vmatpush1.msra.mxu0 0.0
    %204 = vmatprep.subr.mxu0 0.0
    %205 = vmatpush1.msra.mxu0 0.0
    %206 = vmatprep.subr.mxu0 0.0
    %207 = vmatpush1.msra.mxu0 0.0
    %208 = vmatprep.subr.mxu0 0.0
    %209 = vmatpush1.msra.mxu0 0.0
    %210 = vmatprep.subr.mxu0 0.0
    %211 = vmatpush1.msra.mxu0 0.0
    %212 = vmatprep.subr.mxu0 0.0
    %213 = vmatpush1.msra.mxu0 0.0
    %214 = vmatprep.subr.mxu0 0.0
    %215 = vmatpush1.msra.mxu0 0.0
    %216 = vmatprep.subr.mxu0 0.0
    %217 = vmatpush1.msra.mxu0 0.0
    %218 = vmatprep.subr.mxu0 0.0
    %219 = vmatpush1.msra.mxu0 0.0
    %220 = vmatprep.subr.mxu0 0.0
    %221 = vmatpush1.msra.mxu0 0.0
    %222 = vmatprep.subr.mxu0 0.0
    %223 = vmatpush1.msra.mxu0 0.0
    %224 = vmatprep.subr.mxu0 0.0
    %225 = vmatpush1.msra.mxu0 0.0
    %226 = vmatprep.subr.mxu0 0.0
    %227 = vmatpush1.msra.mxu0 0.0
    %228 = vmatprep.subr.mxu0 0.0
    %229 = vmatpush1.msra.mxu0 0.0
    %230 = vmatprep.subr.mxu0 0.0
    %231 = vmatpush1.msra.mxu0 0.0
    %232 = vmatprep.subr.mxu0 0.0
    %233 = vmatpush1.msra.mxu0 0.0
    %234 = vmatprep.mubr.f32.mxu0 0.0
    %235 = vmatmul.mubr.f32.gmra.mrb[0].mxu0 %v159
    %v236 = vpop.f32.mrb[0].mxu0
    %v237 = vadd.f32 0.0, %v236
    %v238 = vpop.f32.mrb[0].mxu0
    %239 = vmatprep.mubr.f32.mxu0 0.0
    %240 = vmatmul.mubr.f32.gmra.mrb[0].mxu0 %v162
    %v241 = vpop.f32.mrb[0].mxu0
    %v242 = vadd.f32 0.0, %v241
    %v243 = vpop.f32.mrb[0].mxu0
    %244 = vmatprep.mubr.f32.mxu0 0.0
    %245 = vmatmul.mubr.f32.gmra.mrb[0].mxu0 %v165
    %v246 = vpop.f32.mrb[0].mxu0
    %v247 = vadd.f32 0.0, %v246
    %v248 = vpop.f32.mrb[0].mxu0
    %249 = vmatprep.mubr.f32.mxu0 0.0
    %250 = vmatmul.mubr.f32.gmra.mrb[0].mxu0 %v168
    %v251 = vpop.f32.mrb[0].mxu0
    %v252 = vadd.f32 0.0, %v251
    %v253 = vpop.f32.mrb[0].mxu0
    %254 = vdwg.mxu0
    %255 = vst.msk [vmem:[#allocation4] sm:$0xff] %vm43, %v237
    %256 = vst.msk [vmem:[#allocation4 + $0x8] sm:$0xff] %vm43, %v242
    %257 = vst.msk [vmem:[#allocation4 + $0x10] sm:$0xff] %vm43, %v247
    %258 = vst.msk [vmem:[#allocation4 + $0x18] sm:$0xff] %vm43, %v252
    // Predicated region
    $region22: #{tpu_custom_call.1} parent=1 // pred_check
      _
    $region23: #{tpu_custom_call.1} parent=1 // pred_check_branch
      %260 = sbr.rel (0) target = $region25
    $region24: #{tpu_custom_call.1} parent=1 // pred_region
      %s262 = ssub.s32 512, 512
      %263 = vsyncadd [#allocation3], %s262
      %s264 = sshll.u32 [#allocation2], 4
      %s265 = int_to_ptr.vmem [resolvable:$true] %s264
      %270 = dma.vmem_to_hbm [thread:$0]  %s265, 512, %s5, [#allocation3], 128, 128, 8
    $region25: #{tpu_custom_call.1} parent=1 // pred_fallthru
      _
    // Predicated region
    $region26: #{tpu_custom_call.1} parent=1 // pred_check
      _
    $region27: #{tpu_custom_call.1} parent=1 // pred_check_branch
      %272 = sbr.rel (0) target = $region29
    $region28: #{tpu_custom_call.1} parent=1 // pred_region
      %s274 = ssub.s32 512, 512
      %275 = vsyncadd [#allocation5], %s274
      %s276 = sshll.u32 [#allocation4], 4
      %s277 = int_to_ptr.vmem [resolvable:$true] %s276
      %282 = dma.vmem_to_hbm [thread:$0]  %s277, 512, %s6, [#allocation5], 128, 128, 8
    $region29: #{tpu_custom_call.1} parent=1 // pred_fallthru
      _
    // Predicated region
    $region30: #{tpu_custom_call.1} parent=1 // pred_check
      _
    $region31: #{tpu_custom_call.1} parent=1 // pred_check_branch
      %284 = sbr.rel (0) target = $region33
    $region32: #{tpu_custom_call.1} parent=1 // pred_region
      %285 = dma.done [#allocation3], 512
    $region33: #{tpu_custom_call.1} parent=1 // pred_fallthru
      _
    // Predicated region
    $region34: #{tpu_custom_call.1} parent=1 // pred_check
      _
    $region35: #{tpu_custom_call.1} parent=1 // pred_check_branch
      %287 = sbr.rel (0) target = $region37
    $region36: #{tpu_custom_call.1} parent=1 // pred_region
      %288 = dma.done [#allocation5], 512
    $region37: #{tpu_custom_call.1} parent=1 // pred_fallthru
      _
    %289 = vsyncpa [#allocation3], 1
    %290 = vsyncpa [#allocation5], 1

</llo_original>
